<compile_context>
chip_gen: v7x
topology: tpu7x:2x2x1
jax: 0.10.0
libtpu: 0.0.40
codegen_flags: <defaults>
</compile_context>

<pallas_src>
import math

import jax
import jax.numpy as jnp
from jax.experimental import pallas as pl
from jax.experimental.pallas import tpu as pltpu

# Batch tile (lane dimension).  Multiple of 128; large enough to amortize the
# per-grid-step overhead, small enough to fit comfortably in VMEM on all of
# v5e (16 MiB default scoped), v6e (128 MiB) and v7x (64 MiB physical).
_TB = 32 * 1024

# Packed-parameter blob layout, (8, 32) float32 (one (8,128) VMEM tile):
#   cols 0:2   w1   (8, 2)
#   col  2     b1   (8, 1)
#   col  3     b2   (8, 1)
#   col  4     w3^T (8, 1)
#   (0, 5)     b3   scalar
#   cols 8:16  w2   (8, 8)
_PCOLS = 32


def _mlp_kernel(x_ref, p_ref, o_ref):
    # x_ref: (2, TB) -- batch on lanes; p_ref: (8, 32) packed params;
    # o_ref: (1, TB)
    x = x_ref[...]
    p = p_ref[...]
    w1 = p[:, 0:2]       # (8, 2)
    b1 = p[:, 2:3]       # (8, 1)
    b2 = p[:, 3:4]       # (8, 1)
    w3t = p[:, 4:5]      # (8, 1)  output weight, transposed
    b3 = p[0:1, 5:6]     # (1, 1)
    w2 = p[:, 8:16]      # (8, 8)

    tb = x.shape[1]

    # Layer 1 (K=2): unrolled VPU broadcast-FMA (MXU would be >99% padding).
    h1 = jnp.tanh(b1 + w1[:, 0:1] * x[0:1, :] + w1[:, 1:2] * x[1:2, :])  # (8, TB)

    # Layer 2 (8x8): offload to the otherwise-idle MXU, freeing the VALU
    # (the saturating slot at large TB on v5e/v6e with no f32 FMA).
    h2 = jnp.tanh(
        jnp.dot(w2, h1,
                preferred_element_type=jnp.float32,
                precision=jax.lax.Precision.HIGHEST)
        + b2)                                                            # (8, TB)

    # Layer 3 (N=1): unrolled VPU broadcast-FMA.
    logits = jnp.broadcast_to(b3, (1, tb))
    for j in range(8):
        logits = logits + w3t[j:j + 1, 0:1] * h2[j:j + 1, :]             # (1, TB)

    # TODO(synk): if profiling shows the EUP is now the binding slot, move one
    # tanh onto a VPU polynomial using the VALU slack freed by the MXU move.
    o_ref[...] = jax.nn.sigmoid(logits).astype(o_ref.dtype)


def _pack_params(params):
    w1, b1, w2, b2, w3, b3 = params
    blob = jnp.zeros((8, _PCOLS), jnp.float32)
    blob = blob.at[:, 0:2].set(w1)
    blob = blob.at[:, 2:3].set(b1)
    blob = blob.at[:, 3:4].set(b2)
    blob = blob.at[:, 4:5].set(w3.T)
    blob = blob.at[0:1, 5:6].set(b3)
    blob = blob.at[:, 8:16].set(w2)
    return blob


@jax.jit
def mlp_forward(x, params):
    """x: (B, 2) float32 -> (B, 1) float32."""
    batch = x.shape[0]
    blob = _pack_params(params)

    # Put batch on the lane axis.  This transpose is the only wrapper-side
    # data movement: no zero-pad, no scatter, no output slice -- Pallas pads
    # the edge-block reads and masks the edge-block writes.
    x_t = x.T.astype(jnp.float32)                     # (2, B)

    # Adapt the tile so tiny calls don't allocate a full 32K-lane block.
    tb = min(_TB, pl.cdiv(batch, 128) * 128)
    grid = (pl.cdiv(batch, tb),)

    out_t = pl.pallas_call(
        _mlp_kernel,
        out_shape=jax.ShapeDtypeStruct((1, batch), jnp.float32),
        grid=grid,
        in_specs=[
            pl.BlockSpec((2, tb), lambda i: (0, i)),       # x tile (streamed)
            pl.BlockSpec((8, _PCOLS), lambda i: (0, 0)),   # packed params (resident)
        ],
        out_specs=pl.BlockSpec((1, tb), lambda i: (0, i)),
        compiler_params=pltpu.CompilerParams(
            dimension_semantics=("parallel",),
            vmem_limit_bytes=32 * 1024 * 1024,
        ),
    )(x_t, blob)

    return out_t.T                                    # (B, 1) -- free reshape


def xavier_uniform(key, fan_out, fan_in, dtype=jnp.float32):
    # torch.nn.init.xavier_uniform_ on an (out, in) weight.
    bound = math.sqrt(6.0 / (fan_in + fan_out))
    return jax.random.uniform(key, (fan_out, fan_in), dtype=dtype,
                              minval=-bound, maxval=bound)


def init_params(key):
    k1, k2, k3 = jax.random.split(key, 3)
    w1 = xavier_uniform(k1, 8, 2)                 # (8, 2)
    b1 = jnp.zeros((8, 1), jnp.float32)
    w2 = xavier_uniform(k2, 8, 8)                 # (8, 8)
    b2 = jnp.zeros((8, 1), jnp.float32)
    w3 = xavier_uniform(k3, 1, 8)                 # (1, 8)
    b3 = jnp.zeros((1, 1), jnp.float32)
    return w1, b1, w2, b2, w3, b3


def reference_forward(x, params):
    w1, b1, w2, b2, w3, b3 = params
    hp = jax.lax.Precision.HIGHEST
    h1 = jnp.tanh(jnp.dot(x, w1.T, precision=hp) + b1.T)
    h2 = jnp.tanh(jnp.dot(h1, w2.T, precision=hp) + b2.T)
    return jax.nn.sigmoid(jnp.dot(h2, w3.T, precision=hp) + b3.T)


if __name__ == "__main__":
    key = jax.random.PRNGKey(0)
    pkey, k1, k2, k3 = jax.random.split(key, 4)
    params = init_params(pkey)

    # Small batch matching the module (batch=8, in=2): exercises the
    # block-larger-than-array / masked-edge-write path.
    x_small = jax.random.normal(k1, (8, 2), dtype=jnp.float32)
    out_small = jax.block_until_ready(mlp_forward(x_small, params))
    ref_small = reference_forward(x_small, params)
    assert out_small.shape == (8, 1)
    assert jnp.allclose(out_small, ref_small, atol=1e-5, rtol=1e-5)

    # Non-multiple-of-128 batch: adaptive tile (1024 lanes), single block.
    x_mid = jax.random.normal(k2, (1000, 2), dtype=jnp.float32)
    out_mid = jax.block_until_ready(mlp_forward(x_mid, params))
    ref_mid = reference_forward(x_mid, params)
    assert out_mid.shape == (1000, 1)
    assert jnp.allclose(out_mid, ref_mid, atol=1e-5, rtol=1e-5)

    # Multi-step grid with a partial last block (40000 = 32768 + 7232).
    x_big = jax.random.normal(k3, (40000, 2), dtype=jnp.float32)
    out_big = jax.block_until_ready(mlp_forward(x_big, params))
    ref_big = reference_forward(x_big, params)
    assert out_big.shape == (40000, 1)
    assert jnp.allclose(out_big, ref_big, atol=1e-5, rtol=1e-5)

    print("KERNEL_OK")
</pallas_src>

<mosaic_0001>
module attributes {stable_mosaic.version = 11 : i64} {
  func.func @_mlp_kernel(%arg0: i32, %arg1: memref<2x128xf32, #tpu.memory_space<vmem>>, %arg2: memref<8x32xf32, #tpu.memory_space<vmem>>, %arg3: memref<1x128xf32, #tpu.memory_space<vmem>>) attributes {dimension_semantics = [#tpu.dimension_semantics<parallel>], iteration_bounds = array<i64: 1>, scalar_prefetch = 0 : i64, scratch_operands = 0 : i64, tpu.core_type = #tpu.core_type<tc>, window_params = [{transform_indices = @transform_0, window_bounds = array<i64: 2, 128>}, {pipeline_mode = #tpu.pipeline_mode<synchronous>, transform_indices = @transform_1, window_bounds = array<i64: 8, 32>}, {transform_indices = @transform_2, window_bounds = array<i64: 1, 128>}]} {
    %c0 = arith.constant 0 : index
    %c0_0 = arith.constant 0 : index
    %0 = vector.load %arg1[%c0, %c0_0] : memref<2x128xf32, #tpu.memory_space<vmem>>, vector<2x128xf32>
    %c0_1 = arith.constant 0 : index
    %c0_2 = arith.constant 0 : index
    %1 = vector.load %arg2[%c0_1, %c0_2] : memref<8x32xf32, #tpu.memory_space<vmem>>, vector<8x32xf32>
    %2 = vector.extract_strided_slice %1 {offsets = [0, 0], sizes = [8, 2], strides = [1, 1]} : vector<8x32xf32> to vector<8x2xf32>
    %3 = vector.extract_strided_slice %1 {offsets = [0, 2], sizes = [8, 1], strides = [1, 1]} : vector<8x32xf32> to vector<8x1xf32>
    %4 = vector.extract_strided_slice %1 {offsets = [0, 3], sizes = [8, 1], strides = [1, 1]} : vector<8x32xf32> to vector<8x1xf32>
    %5 = vector.extract_strided_slice %1 {offsets = [0, 4], sizes = [8, 1], strides = [1, 1]} : vector<8x32xf32> to vector<8x1xf32>
    %6 = vector.extract_strided_slice %1 {offsets = [0, 5], sizes = [1, 1], strides = [1, 1]} : vector<8x32xf32> to vector<1x1xf32>
    %7 = vector.extract_strided_slice %1 {offsets = [0, 8], sizes = [8, 8], strides = [1, 1]} : vector<8x32xf32> to vector<8x8xf32>
    %8 = vector.extract_strided_slice %2 {offsets = [0, 0], sizes = [8, 1], strides = [1, 1]} : vector<8x2xf32> to vector<8x1xf32>
    %9 = vector.extract_strided_slice %0 {offsets = [0, 0], sizes = [1, 128], strides = [1, 1]} : vector<2x128xf32> to vector<1x128xf32>
    %10 = vector.broadcast %8 : vector<8x1xf32> to vector<8x128xf32>
    %11 = vector.broadcast %9 : vector<1x128xf32> to vector<8x128xf32>
    %12 = arith.mulf %10, %11 : vector<8x128xf32>
    %13 = vector.broadcast %3 : vector<8x1xf32> to vector<8x128xf32>
    %14 = arith.addf %13, %12 : vector<8x128xf32>
    %15 = vector.extract_strided_slice %2 {offsets = [0, 1], sizes = [8, 1], strides = [1, 1]} : vector<8x2xf32> to vector<8x1xf32>
    %16 = vector.extract_strided_slice %0 {offsets = [1, 0], sizes = [1, 128], strides = [1, 1]} : vector<2x128xf32> to vector<1x128xf32>
    %17 = vector.broadcast %15 : vector<8x1xf32> to vector<8x128xf32>
    %18 = vector.broadcast %16 : vector<1x128xf32> to vector<8x128xf32>
    %19 = arith.mulf %17, %18 : vector<8x128xf32>
    %20 = arith.addf %14, %19 : vector<8x128xf32>
    %21 = math.tanh %20 : vector<8x128xf32>
    %cst = arith.constant dense<0.000000e+00> : vector<8x128xf32>
    %22 = tpu.matmul %7, %21, %cst {dimension_numbers = #tpu.dot_dimension_numbers<[1], [0], [0], [1], [0, 0, 1, 1], [], []>, precision = #tpu.contract_precision<fp32>} : vector<8x8xf32>, vector<8x128xf32>, vector<8x128xf32> -> vector<8x128xf32>
    %23 = vector.broadcast %4 : vector<8x1xf32> to vector<8x128xf32>
    %24 = arith.addf %22, %23 : vector<8x128xf32>
    %25 = math.tanh %24 : vector<8x128xf32>
    %26 = vector.shape_cast %6 : vector<1x1xf32> to vector<1x1xf32>
    %27 = vector.broadcast %26 : vector<1x1xf32> to vector<1x128xf32>
    %28 = vector.extract_strided_slice %5 {offsets = [0, 0], sizes = [1, 1], strides = [1, 1]} : vector<8x1xf32> to vector<1x1xf32>
    %29 = vector.extract_strided_slice %25 {offsets = [0, 0], sizes = [1, 128], strides = [1, 1]} : vector<8x128xf32> to vector<1x128xf32>
    %30 = vector.broadcast %28 : vector<1x1xf32> to vector<1x128xf32>
    %31 = arith.mulf %30, %29 : vector<1x128xf32>
    %32 = arith.addf %27, %31 : vector<1x128xf32>
    %33 = vector.extract_strided_slice %5 {offsets = [1, 0], sizes = [1, 1], strides = [1, 1]} : vector<8x1xf32> to vector<1x1xf32>
    %34 = vector.extract_strided_slice %25 {offsets = [1, 0], sizes = [1, 128], strides = [1, 1]} : vector<8x128xf32> to vector<1x128xf32>
    %35 = vector.broadcast %33 : vector<1x1xf32> to vector<1x128xf32>
    %36 = arith.mulf %35, %34 : vector<1x128xf32>
    %37 = arith.addf %32, %36 : vector<1x128xf32>
    %38 = vector.extract_strided_slice %5 {offsets = [2, 0], sizes = [1, 1], strides = [1, 1]} : vector<8x1xf32> to vector<1x1xf32>
    %39 = vector.extract_strided_slice %25 {offsets = [2, 0], sizes = [1, 128], strides = [1, 1]} : vector<8x128xf32> to vector<1x128xf32>
    %40 = vector.broadcast %38 : vector<1x1xf32> to vector<1x128xf32>
    %41 = arith.mulf %40, %39 : vector<1x128xf32>
    %42 = arith.addf %37, %41 : vector<1x128xf32>
    %43 = vector.extract_strided_slice %5 {offsets = [3, 0], sizes = [1, 1], strides = [1, 1]} : vector<8x1xf32> to vector<1x1xf32>
    %44 = vector.extract_strided_slice %25 {offsets = [3, 0], sizes = [1, 128], strides = [1, 1]} : vector<8x128xf32> to vector<1x128xf32>
    %45 = vector.broadcast %43 : vector<1x1xf32> to vector<1x128xf32>
    %46 = arith.mulf %45, %44 : vector<1x128xf32>
    %47 = arith.addf %42, %46 : vector<1x128xf32>
    %48 = vector.extract_strided_slice %5 {offsets = [4, 0], sizes = [1, 1], strides = [1, 1]} : vector<8x1xf32> to vector<1x1xf32>
    %49 = vector.extract_strided_slice %25 {offsets = [4, 0], sizes = [1, 128], strides = [1, 1]} : vector<8x128xf32> to vector<1x128xf32>
    %50 = vector.broadcast %48 : vector<1x1xf32> to vector<1x128xf32>
    %51 = arith.mulf %50, %49 : vector<1x128xf32>
    %52 = arith.addf %47, %51 : vector<1x128xf32>
    %53 = vector.extract_strided_slice %5 {offsets = [5, 0], sizes = [1, 1], strides = [1, 1]} : vector<8x1xf32> to vector<1x1xf32>
    %54 = vector.extract_strided_slice %25 {offsets = [5, 0], sizes = [1, 128], strides = [1, 1]} : vector<8x128xf32> to vector<1x128xf32>
    %55 = vector.broadcast %53 : vector<1x1xf32> to vector<1x128xf32>
    %56 = arith.mulf %55, %54 : vector<1x128xf32>
    %57 = arith.addf %52, %56 : vector<1x128xf32>
    %58 = vector.extract_strided_slice %5 {offsets = [6, 0], sizes = [1, 1], strides = [1, 1]} : vector<8x1xf32> to vector<1x1xf32>
    %59 = vector.extract_strided_slice %25 {offsets = [6, 0], sizes = [1, 128], strides = [1, 1]} : vector<8x128xf32> to vector<1x128xf32>
    %60 = vector.broadcast %58 : vector<1x1xf32> to vector<1x128xf32>
    %61 = arith.mulf %60, %59 : vector<1x128xf32>
    %62 = arith.addf %57, %61 : vector<1x128xf32>
    %63 = vector.extract_strided_slice %5 {offsets = [7, 0], sizes = [1, 1], strides = [1, 1]} : vector<8x1xf32> to vector<1x1xf32>
    %64 = vector.extract_strided_slice %25 {offsets = [7, 0], sizes = [1, 128], strides = [1, 1]} : vector<8x128xf32> to vector<1x128xf32>
    %65 = vector.broadcast %63 : vector<1x1xf32> to vector<1x128xf32>
    %66 = arith.mulf %65, %64 : vector<1x128xf32>
    %67 = arith.addf %62, %66 : vector<1x128xf32>
    %68 = arith.negf %67 : vector<1x128xf32>
    %69 = math.exp %68 : vector<1x128xf32>
    %cst_3 = arith.constant 1.000000e+00 : f32
    %70 = vector.broadcast %cst_3 : f32 to vector<1x128xf32>
    %71 = arith.addf %70, %69 : vector<1x128xf32>
    %72 = arith.divf %70, %71 : vector<1x128xf32>
    %c0_4 = arith.constant 0 : index
    %c0_5 = arith.constant 0 : index
    %73 = vector.load %arg3[%c0_4, %c0_5] : memref<1x128xf32, #tpu.memory_space<vmem>>, vector<1x128xf32>
    tpu.vector_store %arg3[%c0_4, %c0_5], %72 {strides = array<i32>} : memref<1x128xf32, #tpu.memory_space<vmem>>, vector<1x128xf32>,
    return
  }
  func.func @transform_0(%arg0: i32) -> (i32, i32) {
    %c0_i32 = arith.constant 0 : i32
    %c0_i32_0 = arith.constant 0 : i32
    return %c0_i32, %arg0 : i32, i32
  }
  func.func @transform_1(%arg0: i32) -> (i32, i32) {
    %c0_i32 = arith.constant 0 : i32
    %c0_i32_0 = arith.constant 0 : i32
    %c0_i32_1 = arith.constant 0 : i32
    return %c0_i32, %c0_i32_0 : i32, i32
  }
  func.func @transform_2(%arg0: i32) -> (i32, i32) {
    %c0_i32 = arith.constant 0 : i32
    %c0_i32_0 = arith.constant 0 : i32
    return %c0_i32, %arg0 : i32, i32
  }
}

</mosaic_0001>

<llo_original>
// kernel: mlp_forward.1
$region0: #{mlp_forward.1}
  #allocation0 [shape = 'u32[]', space=smem, size = 0x4, offset = 0x4, fixed_abs, tag = 'smem constant byte address 0x4 - core index']
  #allocation1 [shape = 'u32[144,128]{1,0:T(1,128)}', space=vmem, size = 0x12000, scoped, tag = 'internal scratch']
  %s0 = inlined_call_operand.vmem [shape: f32[2,8], index: 0, kind: input, shape index: {}]
  %s1 = inlined_call_operand.vmem [shape: f32[8,32], index: 1, kind: input, shape index: {}]
  %s2 = inlined_call_operand.hbm [shape: f32[1,8], index: 2, kind: output, shape index: {}]
  %s3 = sld [smem:[#allocation0]]
  $region18: #{mlp_forward.1} parent=0
    _
  %s5 = ssub.s32 1, %s3
  %s6 = scalar_select 0, %s5, %s3
  $region1: #{mlp_forward.1} parent=0
    #allocation2 [shape = 'u8[512]{0}', space=vmem, size = 0x400, scoped, tag = 'output window, operand 0, single buffered']
    #allocation3 [shape = 's32[1]{0}', space=sflag, size = 0x4, scoped, tag = 'scoped memory for mlp_forward.1']
    %7 = vsyncpa [#allocation3], 0
    // Predicated region
    $region2: #{mlp_forward.1} parent=1 // pred_check
      _
    $region3: #{mlp_forward.1} parent=1 // pred_check_branch
      %9 = sbr.rel (0) target = $region5
    $region4: #{mlp_forward.1} parent=1 // pred_region
      _
    $region5: #{mlp_forward.1} parent=1 // pred_fallthru
      _
    // Predicated region
    $region6: #{mlp_forward.1} parent=1 // pred_check
      _
    $region7: #{mlp_forward.1} parent=1 // pred_check_branch
      %11 = sbr.rel (0) target = $region9
    $region8: #{mlp_forward.1} parent=1 // pred_region
      _
    $region9: #{mlp_forward.1} parent=1 // pred_fallthru
      _
    %v12 = vld [vmem:[%s0] sm:$0x3]
    %v13 = vld [vmem:[%s1] sm:$0xff]
    %15 = vset.pattern.permute.xlu0 0
    %16 = vperm.xlu0 %15, %v13
    %v17 = vpop.permute.xlu0 %16
    %v19 = vlaneseq
    %v20 = vshrl.u32 %v19, 7
    %v21 = vsub.s32 0, %v20
    %v22 = vrot.slane %v12, %v21
    %v23 = vmul.f32 %v17, %v22
    %24 = vset.pattern.permute.xlu0 2
    %25 = vperm.xlu0 %24, %v13
    %v26 = vpop.permute.xlu0 %25
    %v28 = vadd.f32 %v26, %v23
    %29 = vset.pattern.permute.xlu0 1
    %30 = vperm.xlu0 %29, %v13
    %v31 = vpop.permute.xlu0 %30
    %v33 = vlaneseq
    %v34 = vshrl.u32 %v33, 7
    %v35 = vsub.s32 1, %v34
    %v36 = vrot.slane %v12, %v35
    %v37 = vmul.f32 %v31, %v36
    %v38 = vadd.f32 %v28, %v37
    %v39 = vtanh.pop %v38
    %40 = vset.pattern.permute.xlu0 3
    %41 = vperm.xlu0 %40, %v13
    %v42 = vpop.permute.xlu0 %41
    %44 = vrot.lane.b32.xlu0 %v13, 120
    %v45 = vpop.permute.xlu0 %44
    %vm46 = vcmask 64512
    %v47 = vsel %vm46, %v45, 0
    %49 = vmatprep.subr.mxu0 0.0
    %v50 = vand.u32 %v39, 4294901760
    %51 = vmatpush1.msra.mxu0 %v50
    %52 = vmatprep.subr.mxu0 0.0
    %53 = vmatpush1.msra.mxu0 0.0
    %54 = vmatprep.subr.mxu0 0.0
    %55 = vmatpush1.msra.mxu0 0.0
    %56 = vmatprep.subr.mxu0 0.0
    %57 = vmatpush1.msra.mxu0 0.0
    %58 = vmatprep.subr.mxu0 0.0
    %59 = vmatpush1.msra.mxu0 0.0
    %60 = vmatprep.subr.mxu0 0.0
    %61 = vmatpush1.msra.mxu0 0.0
    %62 = vmatprep.subr.mxu0 0.0
    %63 = vmatpush1.msra.mxu0 0.0
    %64 = vmatprep.subr.mxu0 0.0
    %65 = vmatpush1.msra.mxu0 0.0
    %66 = vmatprep.subr.mxu0 0.0
    %67 = vmatpush1.msra.mxu0 0.0
    %68 = vmatprep.subr.mxu0 0.0
    %69 = vmatpush1.msra.mxu0 0.0
    %70 = vmatprep.subr.mxu0 0.0
    %71 = vmatpush1.msra.mxu0 0.0
    %72 = vmatprep.subr.mxu0 0.0
    %73 = vmatpush1.msra.mxu0 0.0
    %74 = vmatprep.subr.mxu0 0.0
    %75 = vmatpush1.msra.mxu0 0.0
    %76 = vmatprep.subr.mxu0 0.0
    %77 = vmatpush1.msra.mxu0 0.0
    %78 = vmatprep.subr.mxu0 0.0
    %79 = vmatpush1.msra.mxu0 0.0
    %80 = vmatprep.subr.mxu0 0.0
    %81 = vmatpush1.msra.mxu0 0.0
    %82 = vmatprep.subr.mxu0 0.0
    %83 = vmatpush1.msra.mxu0 0.0
    %84 = vmatprep.subr.mxu0 0.0
    %85 = vmatpush1.msra.mxu0 0.0
    %86 = vmatprep.subr.mxu0 0.0
    %87 = vmatpush1.msra.mxu0 0.0
    %88 = vmatprep.subr.mxu0 0.0
    %89 = vmatpush1.msra.mxu0 0.0
    %90 = vmatprep.subr.mxu0 0.0
    %91 = vmatpush1.msra.mxu0 0.0
    %92 = vmatprep.subr.mxu0 0.0
    %93 = vmatpush1.msra.mxu0 0.0
    %94 = vmatprep.subr.mxu0 0.0
    %95 = vmatpush1.msra.mxu0 0.0
    %96 = vmatprep.subr.mxu0 0.0
    %97 = vmatpush1.msra.mxu0 0.0
    %98 = vmatprep.subr.mxu0 0.0
    %99 = vmatpush1.msra.mxu0 0.0
    %100 = vmatprep.subr.mxu0 0.0
    %101 = vmatpush1.msra.mxu0 0.0
    %102 = vmatprep.subr.mxu0 0.0
    %103 = vmatpush1.msra.mxu0 0.0
    %104 = vmatprep.subr.mxu0 0.0
    %105 = vmatpush1.msra.mxu0 0.0
    %106 = vmatprep.subr.mxu0 0.0
    %107 = vmatpush1.msra.mxu0 0.0
    %108 = vmatprep.subr.mxu0 0.0
    %109 = vmatpush1.msra.mxu0 0.0
    %110 = vmatprep.subr.mxu0 0.0
    %111 = vmatpush1.msra.mxu0 0.0
    %112 = vmatprep.subr.mxu0 0.0
    %113 = vmatpush1.msra.mxu0 0.0
    %114 = vmatprep.mubr.f32.mxu0 0.0
    %v115 = vand.u32 %v47, 4294901760
    %v116 = vsub.f32 %v47, %v115
    %v117 = vand.u32 %v116, 4294901760
    %v118 = vsub.f32 %v116, %v117
    %v119 = vand.u32 %v118, 4294901760
    %120 = vmatmul.mubr.f32.gmra.mrb[0].mxu0 %v119
    %v121 = vpop.f32.mrb[0].mxu0
    %v122 = vadd.f32 %v42, %v121
    %v123 = vpop.f32.mrb[0].mxu0
    %124 = vdwg.mxu0
    %125 = vmatprep.subr.mxu0 0.0
    %v126 = vand.u32 %v39, 4294901760
    %v127 = vsub.f32 %v39, %v126
    %v128 = vand.u32 %v127, 4294901760
    %v129 = vsub.f32 %v127, %v128
    %v130 = vand.u32 %v129, 4294901760
    %131 = vmatpush1.msra.mxu0 %v130
    %132 = vmatprep.subr.mxu0 0.0
    %133 = vmatpush1.msra.mxu0 0.0
    %134 = vmatprep.subr.mxu0 0.0
    %135 = vmatpush1.msra.mxu0 0.0
    %136 = vmatprep.subr.mxu0 0.0
    %137 = vmatpush1.msra.mxu0 0.0
    %138 = vmatprep.subr.mxu0 0.0
    %139 = vmatpush1.msra.mxu0 0.0
    %140 = vmatprep.subr.mxu0 0.0
    %141 = vmatpush1.msra.mxu0 0.0
    %142 = vmatprep.subr.mxu0 0.0
    %143 = vmatpush1.msra.mxu0 0.0
    %144 = vmatprep.subr.mxu0 0.0
    %145 = vmatpush1.msra.mxu0 0.0
    %146 = vmatprep.subr.mxu0 0.0
    %147 = vmatpush1.msra.mxu0 0.0
    %148 = vmatprep.subr.mxu0 0.0
    %149 = vmatpush1.msra.mxu0 0.0
    %150 = vmatprep.subr.mxu0 0.0
    %151 = vmatpush1.msra.mxu0 0.0
    %152 = vmatprep.subr.mxu0 0.0
    %153 = vmatpush1.msra.mxu0 0.0
    %154 = vmatprep.subr.mxu0 0.0
    %155 = vmatpush1.msra.mxu0 0.0
    %156 = vmatprep.subr.mxu0 0.0
    %157 = vmatpush1.msra.mxu0 0.0
    %158 = vmatprep.subr.mxu0 0.0
    %159 = vmatpush1.msra.mxu0 0.0
    %160 = vmatprep.subr.mxu0 0.0
    %161 = vmatpush1.msra.mxu0 0.0
    %162 = vmatprep.subr.mxu0 0.0
    %163 = vmatpush1.msra.mxu0 0.0
    %164 = vmatprep.subr.mxu0 0.0
    %165 = vmatpush1.msra.mxu0 0.0
    %166 = vmatprep.subr.mxu0 0.0
    %167 = vmatpush1.msra.mxu0 0.0
    %168 = vmatprep.subr.mxu0 0.0
    %169 = vmatpush1.msra.mxu0 0.0
    %170 = vmatprep.subr.mxu0 0.0
    %171 = vmatpush1.msra.mxu0 0.0
    %172 = vmatprep.subr.mxu0 0.0
    %173 = vmatpush1.msra.mxu0 0.0
    %174 = vmatprep.subr.mxu0 0.0
    %175 = vmatpush1.msra.mxu0 0.0
    %176 = vmatprep.subr.mxu0 0.0
    %177 = vmatpush1.msra.mxu0 0.0
    %178 = vmatprep.subr.mxu0 0.0
    %179 = vmatpush1.msra.mxu0 0.0
    %180 = vmatprep.subr.mxu0 0.0
    %181 = vmatpush1.msra.mxu0 0.0
    %182 = vmatprep.subr.mxu0 0.0
    %183 = vmatpush1.msra.mxu0 0.0
    %184 = vmatprep.subr.mxu0 0.0
    %185 = vmatpush1.msra.mxu0 0.0
    %186 = vmatprep.subr.mxu0 0.0
    %187 = vmatpush1.msra.mxu0 0.0
    %188 = vmatprep.subr.mxu0 0.0
    %189 = vmatpush1.msra.mxu0 0.0
    %190 = vmatprep.subr.mxu0 0.0
    %191 = vmatpush1.msra.mxu0 0.0
    %192 = vmatprep.subr.mxu0 0.0
    %193 = vmatpush1.msra.mxu0 0.0
    %194 = vmatprep.mubr.f32.mxu0 0.0
    %v195 = vand.u32 %v47, 4294901760
    %196 = vmatmul.mubr.f32.gmra.mrb[0].mxu0 %v195
    %v197 = vpop.f32.mrb[0].mxu0
    %v198 = vadd.f32 %v122, %v197
    %v199 = vpop.f32.mrb[0].mxu0
    %200 = vdwg.mxu0
    %201 = vmatprep.subr.mxu0 0.0
    %v202 = vand.u32 %v39, 4294901760
    %v203 = vsub.f32 %v39, %v202
    %204 = vmatpush1.msra.mxu0 %v203
    %205 = vmatprep.subr.mxu0 0.0
    %206 = vmatpush1.msra.mxu0 0.0
    %207 = vmatprep.subr.mxu0 0.0
    %208 = vmatpush1.msra.mxu0 0.0
    %209 = vmatprep.subr.mxu0 0.0
    %210 = vmatpush1.msra.mxu0 0.0
    %211 = vmatprep.subr.mxu0 0.0
    %212 = vmatpush1.msra.mxu0 0.0
    %213 = vmatprep.subr.mxu0 0.0
    %214 = vmatpush1.msra.mxu0 0.0
    %215 = vmatprep.subr.mxu0 0.0
    %216 = vmatpush1.msra.mxu0 0.0
    %217 = vmatprep.subr.mxu0 0.0
    %218 = vmatpush1.msra.mxu0 0.0
    %219 = vmatprep.subr.mxu0 0.0
    %220 = vmatpush1.msra.mxu0 0.0
    %221 = vmatprep.subr.mxu0 0.0
    %222 = vmatpush1.msra.mxu0 0.0
    %223 = vmatprep.subr.mxu0 0.0
    %224 = vmatpush1.msra.mxu0 0.0
    %225 = vmatprep.subr.mxu0 0.0
    %226 = vmatpush1.msra.mxu0 0.0
    %227 = vmatprep.subr.mxu0 0.0
    %228 = vmatpush1.msra.mxu0 0.0
    %229 = vmatprep.subr.mxu0 0.0
    %230 = vmatpush1.msra.mxu0 0.0
    %231 = vmatprep.subr.mxu0 0.0
    %232 = vmatpush1.msra.mxu0 0.0
    %233 = vmatprep.subr.mxu0 0.0
    %234 = vmatpush1.msra.mxu0 0.0
    %235 = vmatprep.subr.mxu0 0.0
    %236 = vmatpush1.msra.mxu0 0.0
    %237 = vmatprep.subr.mxu0 0.0
    %238 = vmatpush1.msra.mxu0 0.0
    %239 = vmatprep.subr.mxu0 0.0
    %240 = vmatpush1.msra.mxu0 0.0
    %241 = vmatprep.subr.mxu0 0.0
    %242 = vmatpush1.msra.mxu0 0.0
    %243 = vmatprep.subr.mxu0 0.0
    %244 = vmatpush1.msra.mxu0 0.0
    %245 = vmatprep.subr.mxu0 0.0
    %246 = vmatpush1.msra.mxu0 0.0
    %247 = vmatprep.subr.mxu0 0.0
    %248 = vmatpush1.msra.mxu0 0.0
    %249 = vmatprep.subr.mxu0 0.0
    %250 = vmatpush1.msra.mxu0 0.0
    %251 = vmatprep.subr.mxu0 0.0
    %252 = vmatpush1.msra.mxu0 0.0
    %253 = vmatprep.subr.mxu0 0.0
    %254 = vmatpush1.msra.mxu0 0.0
    %255 = vmatprep.subr.mxu0 0.0
    %256 = vmatpush1.msra.mxu0 0.0
    %257 = vmatprep.subr.mxu0 0.0
    %258 = vmatpush1.msra.mxu0 0.0
    %259 = vmatprep.subr.mxu0 0.0
    %260 = vmatpush1.msra.mxu0 0.0
    %261 = vmatprep.subr.mxu0 0.0
    %262 = vmatpush1.msra.mxu0 0.0
    %263 = vmatprep.subr.mxu0 0.0
    %264 = vmatpush1.msra.mxu0 0.0
    %265 = vmatprep.subr.mxu0 0.0
    %266 = vmatpush1.msra.mxu0 0.0
    %267 = vmatprep.mubr.f32.mxu0 0.0
    %v268 = vand.u32 %v47, 4294901760
    %v269 = vsub.f32 %v47, %v268
    %270 = vmatmul.mubr.f32.gmra.mrb[0].mxu0 %v269
    %v271 = vpop.f32.mrb[0].mxu0
    %v272 = vadd.f32 %v198, %v271
    %v273 = vpop.f32.mrb[0].mxu0
    %274 = vdwg.mxu0
    %275 = vmatprep.subr.mxu0 0.0
    %v276 = vand.u32 %v39, 4294901760
    %277 = vmatpush1.msra.mxu0 %v276
    %278 = vmatprep.subr.mxu0 0.0
    %279 = vmatpush1.msra.mxu0 0.0
    %280 = vmatprep.subr.mxu0 0.0
    %281 = vmatpush1.msra.mxu0 0.0
    %282 = vmatprep.subr.mxu0 0.0
    %283 = vmatpush1.msra.mxu0 0.0
    %284 = vmatprep.subr.mxu0 0.0
    %285 = vmatpush1.msra.mxu0 0.0
    %286 = vmatprep.subr.mxu0 0.0
    %287 = vmatpush1.msra.mxu0 0.0
    %288 = vmatprep.subr.mxu0 0.0
    %289 = vmatpush1.msra.mxu0 0.0
    %290 = vmatprep.subr.mxu0 0.0
    %291 = vmatpush1.msra.mxu0 0.0
    %292 = vmatprep.subr.mxu0 0.0
    %293 = vmatpush1.msra.mxu0 0.0
    %294 = vmatprep.subr.mxu0 0.0
    %295 = vmatpush1.msra.mxu0 0.0
    %296 = vmatprep.subr.mxu0 0.0
    %297 = vmatpush1.msra.mxu0 0.0
    %298 = vmatprep.subr.mxu0 0.0
    %299 = vmatpush1.msra.mxu0 0.0
    %300 = vmatprep.subr.mxu0 0.0
    %301 = vmatpush1.msra.mxu0 0.0
    %302 = vmatprep.subr.mxu0 0.0
    %303 = vmatpush1.msra.mxu0 0.0
    %304 = vmatprep.subr.mxu0 0.0
    %305 = vmatpush1.msra.mxu0 0.0
    %306 = vmatprep.subr.mxu0 0.0
    %307 = vmatpush1.msra.mxu0 0.0
    %308 = vmatprep.subr.mxu0 0.0
    %309 = vmatpush1.msra.mxu0 0.0
    %310 = vmatprep.subr.mxu0 0.0
    %311 = vmatpush1.msra.mxu0 0.0
    %312 = vmatprep.subr.mxu0 0.0
    %313 = vmatpush1.msra.mxu0 0.0
    %314 = vmatprep.subr.mxu0 0.0
    %315 = vmatpush1.msra.mxu0 0.0
    %316 = vmatprep.subr.mxu0 0.0
    %317 = vmatpush1.msra.mxu0 0.0
    %318 = vmatprep.subr.mxu0 0.0
    %319 = vmatpush1.msra.mxu0 0.0
    %320 = vmatprep.subr.mxu0 0.0
    %321 = vmatpush1.msra.mxu0 0.0
    %322 = vmatprep.subr.mxu0 0.0
    %323 = vmatpush1.msra.mxu0 0.0
    %324 = vmatprep.subr.mxu0 0.0
    %325 = vmatpush1.msra.mxu0 0.0
    %326 = vmatprep.subr.mxu0 0.0
    %327 = vmatpush1.msra.mxu0 0.0
    %328 = vmatprep.subr.mxu0 0.0
    %329 = vmatpush1.msra.mxu0 0.0
    %330 = vmatprep.subr.mxu0 0.0
    %331 = vmatpush1.msra.mxu0 0.0
    %332 = vmatprep.subr.mxu0 0.0
    %333 = vmatpush1.msra.mxu0 0.0
    %334 = vmatprep.subr.mxu0 0.0
    %335 = vmatpush1.msra.mxu0 0.0
    %336 = vmatprep.subr.mxu0 0.0
    %337 = vmatpush1.msra.mxu0 0.0
    %338 = vmatprep.subr.mxu0 0.0
    %339 = vmatpush1.msra.mxu0 0.0
    %340 = vmatprep.mubr.f32.mxu0 0.0
    %v341 = vand.u32 %v47, 4294901760
    %v342 = vsub.f32 %v47, %v341
    %v343 = vand.u32 %v342, 4294901760
    %344 = vmatmul.mubr.f32.gmra.mrb[0].mxu0 %v343
    %v345 = vpop.f32.mrb[0].mxu0
    %v346 = vadd.f32 %v272, %v345
    %v347 = vpop.f32.mrb[0].mxu0
    %348 = vdwg.mxu0
    %349 = vmatprep.subr.mxu0 0.0
    %v350 = vand.u32 %v39, 4294901760
    %v351 = vsub.f32 %v39, %v350
    %v352 = vand.u32 %v351, 4294901760
    %353 = vmatpush1.msra.mxu0 %v352
    %354 = vmatprep.subr.mxu0 0.0
    %355 = vmatpush1.msra.mxu0 0.0
    %356 = vmatprep.subr.mxu0 0.0
    %357 = vmatpush1.msra.mxu0 0.0
    %358 = vmatprep.subr.mxu0 0.0
    %359 = vmatpush1.msra.mxu0 0.0
    %360 = vmatprep.subr.mxu0 0.0
    %361 = vmatpush1.msra.mxu0 0.0
    %362 = vmatprep.subr.mxu0 0.0
    %363 = vmatpush1.msra.mxu0 0.0
    %364 = vmatprep.subr.mxu0 0.0
    %365 = vmatpush1.msra.mxu0 0.0
    %366 = vmatprep.subr.mxu0 0.0
    %367 = vmatpush1.msra.mxu0 0.0
    %368 = vmatprep.subr.mxu0 0.0
    %369 = vmatpush1.msra.mxu0 0.0
    %370 = vmatprep.subr.mxu0 0.0
    %371 = vmatpush1.msra.mxu0 0.0
    %372 = vmatprep.subr.mxu0 0.0
    %373 = vmatpush1.msra.mxu0 0.0
    %374 = vmatprep.subr.mxu0 0.0
    %375 = vmatpush1.msra.mxu0 0.0
    %376 = vmatprep.subr.mxu0 0.0
    %377 = vmatpush1.msra.mxu0 0.0
    %378 = vmatprep.subr.mxu0 0.0
    %379 = vmatpush1.msra.mxu0 0.0
    %380 = vmatprep.subr.mxu0 0.0
    %381 = vmatpush1.msra.mxu0 0.0
    %382 = vmatprep.subr.mxu0 0.0
    %383 = vmatpush1.msra.mxu0 0.0
    %384 = vmatprep.subr.mxu0 0.0
    %385 = vmatpush1.msra.mxu0 0.0
    %386 = vmatprep.subr.mxu0 0.0
    %387 = vmatpush1.msra.mxu0 0.0
    %388 = vmatprep.subr.mxu0 0.0
    %389 = vmatpush1.msra.mxu0 0.0
    %390 = vmatprep.subr.mxu0 0.0
    %391 = vmatpush1.msra.mxu0 0.0
    %392 = vmatprep.subr.mxu0 0.0
    %393 = vmatpush1.msra.mxu0 0.0
    %394 = vmatprep.subr.mxu0 0.0
    %395 = vmatpush1.msra.mxu0 0.0
    %396 = vmatprep.subr.mxu0 0.0
    %397 = vmatpush1.msra.mxu0 0.0
    %398 = vmatprep.subr.mxu0 0.0
    %399 = vmatpush1.msra.mxu0 0.0
    %400 = vmatprep.subr.mxu0 0.0
    %401 = vmatpush1.msra.mxu0 0.0
    %402 = vmatprep.subr.mxu0 0.0
    %403 = vmatpush1.msra.mxu0 0.0
    %404 = vmatprep.subr.mxu0 0.0
    %405 = vmatpush1.msra.mxu0 0.0
    %406 = vmatprep.subr.mxu0 0.0
    %407 = vmatpush1.msra.mxu0 0.0
    %408 = vmatprep.subr.mxu0 0.0
    %409 = vmatpush1.msra.mxu0 0.0
    %410 = vmatprep.subr.mxu0 0.0
    %411 = vmatpush1.msra.mxu0 0.0
    %412 = vmatprep.subr.mxu0 0.0
    %413 = vmatpush1.msra.mxu0 0.0
    %414 = vmatprep.subr.mxu0 0.0
    %415 = vmatpush1.msra.mxu0 0.0
    %416 = vmatprep.mubr.f32.mxu0 0.0
    %v417 = vand.u32 %v47, 4294901760
    %418 = vmatmul.mubr.f32.gmra.mrb[0].mxu0 %v417
    %v419 = vpop.f32.mrb[0].mxu0
    %v420 = vadd.f32 %v346, %v419
    %v421 = vpop.f32.mrb[0].mxu0
    %422 = vdwg.mxu0
    %423 = vmatprep.subr.mxu0 0.0
    %v424 = vand.u32 %v39, 4294901760
    %425 = vmatpush1.msra.mxu0 %v424
    %426 = vmatprep.subr.mxu0 0.0
    %427 = vmatpush1.msra.mxu0 0.0
    %428 = vmatprep.subr.mxu0 0.0
    %429 = vmatpush1.msra.mxu0 0.0
    %430 = vmatprep.subr.mxu0 0.0
    %431 = vmatpush1.msra.mxu0 0.0
    %432 = vmatprep.subr.mxu0 0.0
    %433 = vmatpush1.msra.mxu0 0.0
    %434 = vmatprep.subr.mxu0 0.0
    %435 = vmatpush1.msra.mxu0 0.0
    %436 = vmatprep.subr.mxu0 0.0
    %437 = vmatpush1.msra.mxu0 0.0
    %438 = vmatprep.subr.mxu0 0.0
    %439 = vmatpush1.msra.mxu0 0.0
    %440 = vmatprep.subr.mxu0 0.0
    %441 = vmatpush1.msra.mxu0 0.0
    %442 = vmatprep.subr.mxu0 0.0
    %443 = vmatpush1.msra.mxu0 0.0
    %444 = vmatprep.subr.mxu0 0.0
    %445 = vmatpush1.msra.mxu0 0.0
    %446 = vmatprep.subr.mxu0 0.0
    %447 = vmatpush1.msra.mxu0 0.0
    %448 = vmatprep.subr.mxu0 0.0
    %449 = vmatpush1.msra.mxu0 0.0
    %450 = vmatprep.subr.mxu0 0.0
    %451 = vmatpush1.msra.mxu0 0.0
    %452 = vmatprep.subr.mxu0 0.0
    %453 = vmatpush1.msra.mxu0 0.0
    %454 = vmatprep.subr.mxu0 0.0
    %455 = vmatpush1.msra.mxu0 0.0
    %456 = vmatprep.subr.mxu0 0.0
    %457 = vmatpush1.msra.mxu0 0.0
    %458 = vmatprep.subr.mxu0 0.0
    %459 = vmatpush1.msra.mxu0 0.0
    %460 = vmatprep.subr.mxu0 0.0
    %461 = vmatpush1.msra.mxu0 0.0
    %462 = vmatprep.subr.mxu0 0.0
    %463 = vmatpush1.msra.mxu0 0.0
    %464 = vmatprep.subr.mxu0 0.0
    %465 = vmatpush1.msra.mxu0 0.0
    %466 = vmatprep.subr.mxu0 0.0
    %467 = vmatpush1.msra.mxu0 0.0
    %468 = vmatprep.subr.mxu0 0.0
    %469 = vmatpush1.msra.mxu0 0.0
    %470 = vmatprep.subr.mxu0 0.0
    %471 = vmatpush1.msra.mxu0 0.0
    %472 = vmatprep.subr.mxu0 0.0
    %473 = vmatpush1.msra.mxu0 0.0
    %474 = vmatprep.subr.mxu0 0.0
    %475 = vmatpush1.msra.mxu0 0.0
    %476 = vmatprep.subr.mxu0 0.0
    %477 = vmatpush1.msra.mxu0 0.0
    %478 = vmatprep.subr.mxu0 0.0
    %479 = vmatpush1.msra.mxu0 0.0
    %480 = vmatprep.subr.mxu0 0.0
    %481 = vmatpush1.msra.mxu0 0.0
    %482 = vmatprep.subr.mxu0 0.0
    %483 = vmatpush1.msra.mxu0 0.0
    %484 = vmatprep.subr.mxu0 0.0
    %485 = vmatpush1.msra.mxu0 0.0
    %486 = vmatprep.subr.mxu0 0.0
    %487 = vmatpush1.msra.mxu0 0.0
    %488 = vmatprep.mubr.f32.mxu0 0.0
    %v489 = vand.u32 %v47, 4294901760
    %490 = vmatmul.mubr.f32.gmra.mrb[0].mxu0 %v489
    %v491 = vpop.f32.mrb[0].mxu0
    %v492 = vadd.f32 %v420, %v491
    %v493 = vpop.f32.mrb[0].mxu0
    %494 = vdwg.mxu0
    %v495 = vtanh.pop %v492
    %496 = vset.pattern.permute.xlu0 5
    %497 = vperm.xlu0 %496, %v13
    %v498 = vpop.permute.xlu0 %497
    %500 = vset.pattern.permute.xlu0 4
    %501 = vperm.xlu0 %500, %v13
    %v502 = vpop.permute.xlu0 %501
    %v504 = vmul.f32 %v502, %v495
    %v505 = vadd.f32 %v498, %v504
    %v507 = vrot.slane %v504, 1
    %v509 = vadd.f32 %v505, %v507
    %v510 = vrot.slane %v504, 2
    %v512 = vadd.f32 %v509, %v510
    %v513 = vrot.slane %v504, 3
    %v515 = vadd.f32 %v512, %v513
    %v516 = vrot.slane %v504, 4
    %v518 = vadd.f32 %v515, %v516
    %v519 = vrot.slane %v504, 5
    %v521 = vadd.f32 %v518, %v519
    %v522 = vrot.slane %v504, 6
    %v524 = vadd.f32 %v521, %v522
    %v525 = vrot.slane %v504, 7
    %v527 = vadd.f32 %v524, %v525
    %v528 = vxor.u32 %v527, 2147483648
    %v529 = vmul.f32 %v528, 1.442695
    %v530 = vpow.pop %v529
    %v531 = vadd.f32 %v530, 1.0
    %v532 = vrcp.pop %v531
    %v533 = vmul.f32 1.0, %v532
    %534 = vst [vmem:[#allocation2] sm:$0x1] %v533
    // Predicated region
    $region10: #{mlp_forward.1} parent=1 // pred_check
      _
    $region11: #{mlp_forward.1} parent=1 // pred_check_branch
      %536 = sbr.rel (0) target = $region13
    $region12: #{mlp_forward.1} parent=1 // pred_region
      %s538 = ssub.s32 16, 16
      %539 = vsyncadd [#allocation3], %s538
      %s541 = sshll.u32 [#allocation2], 4
      %s542 = int_to_ptr.vmem [resolvable:$true] %s541
      %544 = dma.vmem_to_hbm [thread:$0]  %s542, 16, %s2, [#allocation3]
    $region13: #{mlp_forward.1} parent=1 // pred_fallthru
      _
    // Predicated region
    $region14: #{mlp_forward.1} parent=1 // pred_check
      _
    $region15: #{mlp_forward.1} parent=1 // pred_check_branch
      %546 = sbr.rel (0) target = $region17
    $region16: #{mlp_forward.1} parent=1 // pred_region
      %547 = dma.done [#allocation3], 16
    $region17: #{mlp_forward.1} parent=1 // pred_fallthru
      _
    %548 = vsyncpa [#allocation3], 1

</llo_original>
